<compile_context>
chip_gen: v7x
topology: tpu7x:2x2x1
jax: 0.10.0
libtpu: 0.0.40
codegen_flags: <defaults>
</compile_context>

<pallas_src>
import jax
import jax.numpy as jnp
from jax.experimental import pallas as pl
from jax.experimental.pallas import tpu as pltpu

KH = KW = 4
STRIDE = 2
PAD = 1
NEG_SLOPE = 0.2
LANES = 128


def _conv_lrelu_kernel(xm_ref, xh_ref, w_ref, b_ref, o_ref, p_ref):
    """One (batch, row-tile) grid step.

    xm_ref: (1, TR, Wq, 4C)  bf16  phase-packed input rows r0 .. r0+TR-1
    xh_ref: (1, 1,  Wq, 4C)  bf16  halo row r0+TR
    w_ref : (16C, Fp)        bf16  weights, K ordered (dr, dc, s, t, c)
    b_ref : (1, Fp)          f32   zero-padded bias
    o_ref : (1, F, TR*Wo)          NCHW-flattened output tile (real F only)
    p_ref : (TR, Wo, 16C)    bf16  VMEM scratch: fused im2col patch matrix
    """
    tr = xm_ref.shape[1]
    c4 = xm_ref.shape[3]
    f = o_ref.shape[1]
    wo = p_ref.shape[1]
    k = 4 * c4

    # Build the full K=16C patch matrix once, straight from the input blocks.
    for j, (dr, dc) in enumerate(((0, 0), (0, 1), (1, 0), (1, 1))):
        slab = slice(j * c4, (j + 1) * c4)
        if dr == 0:
            p_ref[:, :, slab] = xm_ref[0, 0:tr, dc:dc + wo, :]
        else:
            if tr > 1:
                p_ref[0:tr - 1, :, slab] = xm_ref[0, 1:tr, dc:dc + wo, :]
            p_ref[tr - 1:tr, :, slab] = xh_ref[0, 0:1, dc:dc + wo, :]

    # Single fused GEMM on the MXU: bf16 x bf16 -> f32 accumulator.
    acc = jnp.dot(p_ref[...].reshape(tr * wo, k), w_ref[...],
                  preferred_element_type=jnp.float32)
    acc = acc + b_ref[...]                              # bias (f32)
    acc = jnp.where(acc > 0.0, acc, NEG_SLOPE * acc)    # LeakyReLU(0.2)

    # XLU transpose to channels-major; store only the real F channels (NCHW).
    acc_t = jnp.transpose(acc)                          # (Fp, TR*Wo)
    o_ref[...] = acc_t[:f, :].reshape(1, f, tr * wo).astype(o_ref.dtype)


def firstconv2d_forward(x, weight, bias, *, block_rows=None,
                        vmem_budget=20 * 2**20):
    """
    x:      (N, C, H, W)    NCHW, like PyTorch
    weight: (F, C, 4, 4)    like nn.Conv2d.weight
    bias:   (F,)            like nn.Conv2d.bias
    returns (N, F, Ho, Wo)  NCHW
    """
    N, C, H, W = x.shape
    F = weight.shape[0]
    Ho = (H + 2 * PAD - KH) // STRIDE + 1
    Wo = (W + 2 * PAD - KW) // STRIDE + 1
    C4 = 4 * C                      # channels after packing the 4 stride-2 phases
    K = 4 * C4                      # full im2col contraction = 16 * C
    Fp = ((F + LANES - 1) // LANES) * LANES   # pad out_feat to lane width (GEMM only)

    # ---- wrapper-side layout glue (single pass, bf16 to halve bytes) --------
    xb = x.astype(jnp.bfloat16)
    x_nhwc = jnp.transpose(xb, (0, 2, 3, 1))
    Hp, Wp = H + 2 * PAD, W + 2 * PAD
    eh, ew = Hp % 2, Wp % 2         # extra zero row/col so padded dims are even
    xp = jnp.pad(x_nhwc, ((0, 0), (PAD, PAD + eh), (PAD, PAD + ew), (0, 0)))
    # stride-2 phases packed along channels; last-dim order = (s, t, c)
    xph = jnp.concatenate(
        [xp[:, s::2, t::2, :] for s in (0, 1) for t in (0, 1)], axis=-1)
    Hq, Wq = xph.shape[1], xph.shape[2]
    assert Hq >= Ho + 1 and Wq >= Wo + 1, (Hq, Ho, Wq, Wo)   # halo DMA in bounds

    # Weight reordered so K runs (dr, dc, s, t, c), matching the kernel; pad F.
    # weight[f, c, kh, kw] with kh = 2*dr + s, kw = 2*dc + t.
    w_r = jnp.transpose(weight, (2, 3, 1, 0)).reshape(2, 2, 2, 2, C, F)
    w_r = jnp.transpose(w_r, (0, 2, 1, 3, 4, 5)).reshape(K, F)
    w_mat = jnp.pad(w_r, ((0, 0), (0, Fp - F))).astype(jnp.bfloat16)
    b_mat = jnp.pad(bias.reshape(1, F), ((0, 0), (0, Fp - F))).astype(jnp.float32)

    # ---- row-tile size: as big as the VMEM budget allows (amortize per-step
    #      overhead), while keeping BlockSpec tiling rules valid.
    out_it = jnp.dtype(x.dtype).itemsize

    def _vmem(tr):
        xm = tr * Wq * C4 * 2           # bf16 main block
        halo = Wq * C4 * 2
        w = K * Fp * 2
        b = Fp * 4
        patch = tr * Wo * K * 2         # bf16 patch scratch
        acc = 2 * tr * Wo * Fp * 4      # f32 accumulator + transposed copy
        outb = F * tr * Wo * out_it
        return 2 * (xm + halo + w + b + outb) + patch + acc  # x2: double-buffer

    if block_rows is None:
        cands = sorted(
            {d for d in range(1, Ho + 1)
             if Ho % d == 0 and (d == Ho or (d * Wo) % LANES == 0)},
            reverse=True)
        TR = cands[-1]
        for d in cands:
            if _vmem(d) <= vmem_budget:
                TR = d
                break
    else:
        TR = block_rows
    assert Ho % TR == 0, (Ho, TR)
    grid = (N, Ho // TR)

    in_specs = [
        pl.BlockSpec((1, TR, Wq, C4), lambda n, i: (n, i, 0, 0)),            # rows
        pl.BlockSpec((1, 1, Wq, C4), lambda n, i: (n, (i + 1) * TR, 0, 0)),  # halo
        pl.BlockSpec((K, Fp), lambda n, i: (0, 0)),                          # weights
        pl.BlockSpec((1, Fp), lambda n, i: (0, 0)),                          # bias
    ]
    out_specs = pl.BlockSpec((1, F, TR * Wo), lambda n, i: (n, 0, i))

    bytes_accessed = int(
        N * (Ho + Ho // TR) * Wq * C4 * 2    # xph fetched: main rows + halo rows
        + K * Fp * 2 + Fp * 4                # weights + bias (resident)
        + N * F * Ho * Wo * out_it)          # output, real F only (NCHW)

    out = pl.pallas_call(
        _conv_lrelu_kernel,
        out_shape=jax.ShapeDtypeStruct((N, F, Ho * Wo), x.dtype),
        grid=grid,
        in_specs=in_specs,
        out_specs=out_specs,
        scratch_shapes=[pltpu.VMEM((TR, Wo, K), jnp.bfloat16)],
        compiler_params=pltpu.CompilerParams(
            dimension_semantics=("parallel", "parallel")),
        cost_estimate=pl.CostEstimate(
            flops=2 * N * Ho * Wo * K * F,   # real F, not padded Fp
            transcendentals=0,
            bytes_accessed=bytes_accessed),
    )(xph, xph, w_mat, b_mat)

    # Free minor-dim split; the kernel already produced NCHW channel order.
    return out.reshape(N, F, Ho, Wo)


def _reference(x, weight, bias):
    y = jax.lax.conv_general_dilated(
        x, weight,
        window_strides=(STRIDE, STRIDE),
        padding=((PAD, PAD), (PAD, PAD)),
        dimension_numbers=("NCHW", "OIHW", "NCHW"))
    y = y + bias.reshape(1, -1, 1, 1)
    return jnp.where(y > 0, y, NEG_SLOPE * y)


if __name__ == "__main__":
    key = jax.random.PRNGKey(0)
    k_x, k_w, k_b = jax.random.split(key, 3)

    N, C, H, W = 2, 4, 16, 16
    F = 8  # out_feat

    x = jax.random.normal(k_x, (N, C, H, W), dtype=jnp.float32)
    # deterministic parameter init (synthetic; matches nn.Conv2d shapes)
    fan_in = C * KH * KW
    bound = 1.0 / (fan_in ** 0.5)
    weight = jax.random.uniform(k_w, (F, C, KH, KW), dtype=jnp.float32,
                                minval=-bound, maxval=bound)
    bias = jax.random.uniform(k_b, (F,), dtype=jnp.float32,
                              minval=-bound, maxval=bound)

    out = firstconv2d_forward(x, weight, bias)
    out = jax.block_until_ready(out)

    ref = _reference(x, weight, bias)
    assert out.shape == (N, F, H // 2, W // 2), out.shape
    # bf16 GEMM operands vs f32 XLA reference -> bf16-appropriate tolerance.
    assert jnp.allclose(out, ref, atol=5e-2, rtol=5e-2), \
        float(jnp.max(jnp.abs(out - ref)))

    print("KERNEL_OK")
</pallas_src>

<mosaic_0001>
module attributes {stable_mosaic.version = 11 : i64} {
  func.func @_conv_lrelu_kernel(%arg0: i32, %arg1: i32, %arg2: memref<1x8x9x16xbf16, #tpu.memory_space<vmem>>, %arg3: memref<1x1x9x16xbf16, #tpu.memory_space<vmem>>, %arg4: memref<64x128xbf16, #tpu.memory_space<vmem>>, %arg5: memref<1x128xf32, #tpu.memory_space<vmem>>, %arg6: memref<1x8x64xf32, #tpu.memory_space<vmem>>, %arg7: memref<8x8x64xbf16, #tpu.memory_space<vmem>>) attributes {dimension_semantics = [#tpu.dimension_semantics<parallel>, #tpu.dimension_semantics<parallel>], iteration_bounds = array<i64: 2, 1>, scalar_prefetch = 0 : i64, scratch_operands = 1 : i64, tpu.core_type = #tpu.core_type<tc>, window_params = [{transform_indices = @transform_0, window_bounds = array<i64: 1, 8, 9, 16>}, {transform_indices = @transform_1, window_bounds = array<i64: 1, 1, 9, 16>}, {pipeline_mode = #tpu.pipeline_mode<synchronous>, transform_indices = @transform_2, window_bounds = array<i64: 64, 128>}, {pipeline_mode = #tpu.pipeline_mode<synchronous>, transform_indices = @transform_3, window_bounds = array<i64: 1, 128>}, {transform_indices = @transform_4, window_bounds = array<i64: 1, 8, 64>}]} {
    %c0 = arith.constant 0 : index
    %c0_0 = arith.constant 0 : index
    %c0_1 = arith.constant 0 : index
    %c0_2 = arith.constant 0 : index
    %0 = vector.load %arg2[%c0, %c0_0, %c0_1, %c0_2] : memref<1x8x9x16xbf16, #tpu.memory_space<vmem>>, vector<1x8x8x16xbf16>
    %1 = vector.shape_cast %0 : vector<1x8x8x16xbf16> to vector<8x8x16xbf16>
    %c0_3 = arith.constant 0 : index
    %c0_4 = arith.constant 0 : index
    %c0_5 = arith.constant 0 : index
    %2 = vector.load %arg7[%c0_3, %c0_4, %c0_5] : memref<8x8x64xbf16, #tpu.memory_space<vmem>>, vector<8x8x16xbf16>
    tpu.vector_store %arg7[%c0_3, %c0_4, %c0_5], %1 {strides = array<i32>} : memref<8x8x64xbf16, #tpu.memory_space<vmem>>, vector<8x8x16xbf16>,
    %c0_6 = arith.constant 0 : index
    %c0_7 = arith.constant 0 : index
    %c1 = arith.constant 1 : index
    %c0_8 = arith.constant 0 : index
    %3 = vector.load %arg2[%c0_6, %c0_7, %c1, %c0_8] : memref<1x8x9x16xbf16, #tpu.memory_space<vmem>>, vector<1x8x8x16xbf16>
    %4 = vector.shape_cast %3 : vector<1x8x8x16xbf16> to vector<8x8x16xbf16>
    %c0_9 = arith.constant 0 : index
    %c0_10 = arith.constant 0 : index
    %c16 = arith.constant 16 : index
    %5 = vector.load %arg7[%c0_9, %c0_10, %c16] : memref<8x8x64xbf16, #tpu.memory_space<vmem>>, vector<8x8x16xbf16>
    tpu.vector_store %arg7[%c0_9, %c0_10, %c16], %4 {strides = array<i32>} : memref<8x8x64xbf16, #tpu.memory_space<vmem>>, vector<8x8x16xbf16>,
    %c0_11 = arith.constant 0 : index
    %c1_12 = arith.constant 1 : index
    %c0_13 = arith.constant 0 : index
    %c0_14 = arith.constant 0 : index
    %6 = vector.load %arg2[%c0_11, %c1_12, %c0_13, %c0_14] : memref<1x8x9x16xbf16, #tpu.memory_space<vmem>>, vector<1x7x8x16xbf16>
    %7 = vector.shape_cast %6 : vector<1x7x8x16xbf16> to vector<7x8x16xbf16>
    %c0_15 = arith.constant 0 : index
    %c0_16 = arith.constant 0 : index
    %c32 = arith.constant 32 : index
    %8 = vector.load %arg7[%c0_15, %c0_16, %c32] : memref<8x8x64xbf16, #tpu.memory_space<vmem>>, vector<7x8x16xbf16>
    tpu.vector_store %arg7[%c0_15, %c0_16, %c32], %7 {strides = array<i32>} : memref<8x8x64xbf16, #tpu.memory_space<vmem>>, vector<7x8x16xbf16>,
    %c0_17 = arith.constant 0 : index
    %c0_18 = arith.constant 0 : index
    %c0_19 = arith.constant 0 : index
    %c0_20 = arith.constant 0 : index
    %9 = vector.load %arg3[%c0_17, %c0_18, %c0_19, %c0_20] : memref<1x1x9x16xbf16, #tpu.memory_space<vmem>>, vector<1x1x8x16xbf16>
    %10 = vector.shape_cast %9 : vector<1x1x8x16xbf16> to vector<1x8x16xbf16>
    %c7 = arith.constant 7 : index
    %c0_21 = arith.constant 0 : index
    %c32_22 = arith.constant 32 : index
    %11 = vector.load %arg7[%c7, %c0_21, %c32_22] : memref<8x8x64xbf16, #tpu.memory_space<vmem>>, vector<1x8x16xbf16>
    tpu.vector_store %arg7[%c7, %c0_21, %c32_22], %10 {strides = array<i32>} : memref<8x8x64xbf16, #tpu.memory_space<vmem>>, vector<1x8x16xbf16>,
    %c0_23 = arith.constant 0 : index
    %c1_24 = arith.constant 1 : index
    %c1_25 = arith.constant 1 : index
    %c0_26 = arith.constant 0 : index
    %12 = vector.load %arg2[%c0_23, %c1_24, %c1_25, %c0_26] : memref<1x8x9x16xbf16, #tpu.memory_space<vmem>>, vector<1x7x8x16xbf16>
    %13 = vector.shape_cast %12 : vector<1x7x8x16xbf16> to vector<7x8x16xbf16>
    %c0_27 = arith.constant 0 : index
    %c0_28 = arith.constant 0 : index
    %c48 = arith.constant 48 : index
    %14 = vector.load %arg7[%c0_27, %c0_28, %c48] : memref<8x8x64xbf16, #tpu.memory_space<vmem>>, vector<7x8x16xbf16>
    tpu.vector_store %arg7[%c0_27, %c0_28, %c48], %13 {strides = array<i32>} : memref<8x8x64xbf16, #tpu.memory_space<vmem>>, vector<7x8x16xbf16>,
    %c0_29 = arith.constant 0 : index
    %c0_30 = arith.constant 0 : index
    %c1_31 = arith.constant 1 : index
    %c0_32 = arith.constant 0 : index
    %15 = vector.load %arg3[%c0_29, %c0_30, %c1_31, %c0_32] : memref<1x1x9x16xbf16, #tpu.memory_space<vmem>>, vector<1x1x8x16xbf16>
    %16 = vector.shape_cast %15 : vector<1x1x8x16xbf16> to vector<1x8x16xbf16>
    %c7_33 = arith.constant 7 : index
    %c0_34 = arith.constant 0 : index
    %c48_35 = arith.constant 48 : index
    %17 = vector.load %arg7[%c7_33, %c0_34, %c48_35] : memref<8x8x64xbf16, #tpu.memory_space<vmem>>, vector<1x8x16xbf16>
    tpu.vector_store %arg7[%c7_33, %c0_34, %c48_35], %16 {strides = array<i32>} : memref<8x8x64xbf16, #tpu.memory_space<vmem>>, vector<1x8x16xbf16>,
    %c0_36 = arith.constant 0 : index
    %c0_37 = arith.constant 0 : index
    %c0_38 = arith.constant 0 : index
    %18 = vector.load %arg7[%c0_36, %c0_37, %c0_38] : memref<8x8x64xbf16, #tpu.memory_space<vmem>>, vector<8x8x64xbf16>
    %19 = vector.shape_cast %18 : vector<8x8x64xbf16> to vector<64x64xbf16>
    %c0_39 = arith.constant 0 : index
    %c0_40 = arith.constant 0 : index
    %20 = vector.load %arg4[%c0_39, %c0_40] : memref<64x128xbf16, #tpu.memory_space<vmem>>, vector<64x128xbf16>
    %cst = arith.constant dense<0.000000e+00> : vector<64x128xf32>
    %21 = tpu.matmul %19, %20, %cst {dimension_numbers = #tpu.dot_dimension_numbers<[1], [0], [0], [1], [0, 0, 1, 1], [], []>} : vector<64x64xbf16>, vector<64x128xbf16>, vector<64x128xf32> -> vector<64x128xf32>
    %c0_41 = arith.constant 0 : index
    %c0_42 = arith.constant 0 : index
    %22 = vector.load %arg5[%c0_41, %c0_42] : memref<1x128xf32, #tpu.memory_space<vmem>>, vector<1x128xf32>
    %23 = vector.broadcast %22 : vector<1x128xf32> to vector<64x128xf32>
    %24 = arith.addf %21, %23 : vector<64x128xf32>
    %cst_43 = arith.constant 0.000000e+00 : f32
    %25 = vector.broadcast %cst_43 : f32 to vector<64x128xf32>
    %26 = arith.cmpf ogt, %24, %25 : vector<64x128xf32>
    %cst_44 = arith.constant 2.000000e-01 : f32
    %27 = vector.broadcast %cst_44 : f32 to vector<64x128xf32>
    %28 = arith.mulf %27, %24 : vector<64x128xf32>
    %29 = arith.select %26, %24, %28 : vector<64x128xi1>, vector<64x128xf32>
    %30 = tpu.transpose %29, [1, 0] : vector<64x128xf32> -> vector<128x64xf32>
    %31 = vector.extract_strided_slice %30 {offsets = [0, 0], sizes = [8, 64], strides = [1, 1]} : vector<128x64xf32> to vector<8x64xf32>
    %32 = vector.shape_cast %31 : vector<8x64xf32> to vector<1x8x64xf32>
    %c0_45 = arith.constant 0 : index
    %c0_46 = arith.constant 0 : index
    %c0_47 = arith.constant 0 : index
    %33 = vector.load %arg6[%c0_45, %c0_46, %c0_47] : memref<1x8x64xf32, #tpu.memory_space<vmem>>, vector<1x8x64xf32>
    tpu.vector_store %arg6[%c0_45, %c0_46, %c0_47], %32 {strides = array<i32>} : memref<1x8x64xf32, #tpu.memory_space<vmem>>, vector<1x8x64xf32>,
    return
  }
  func.func @transform_0(%arg0: i32, %arg1: i32) -> (i32, i32, i32, i32) {
    %c0_i32 = arith.constant 0 : i32
    %c0_i32_0 = arith.constant 0 : i32
    %c0_i32_1 = arith.constant 0 : i32
    return %arg0, %arg1, %c0_i32, %c0_i32_0 : i32, i32, i32, i32
  }
  func.func @transform_1(%arg0: i32, %arg1: i32) -> (i32, i32, i32, i32) {
    %c1_i32 = arith.constant 1 : i32
    %0 = arith.addi %arg1, %c1_i32 : i32
    %c8_i32 = arith.constant 8 : i32
    %1 = arith.muli %0, %c8_i32 : i32
    %c0_i32 = arith.constant 0 : i32
    %c0_i32_0 = arith.constant 0 : i32
    %c0_i32_1 = arith.constant 0 : i32
    return %arg0, %1, %c0_i32, %c0_i32_0 : i32, i32, i32, i32
  }
  func.func @transform_2(%arg0: i32, %arg1: i32) -> (i32, i32) {
    %c0_i32 = arith.constant 0 : i32
    %c0_i32_0 = arith.constant 0 : i32
    %c0_i32_1 = arith.constant 0 : i32
    return %c0_i32, %c0_i32_0 : i32, i32
  }
  func.func @transform_3(%arg0: i32, %arg1: i32) -> (i32, i32) {
    %c0_i32 = arith.constant 0 : i32
    %c0_i32_0 = arith.constant 0 : i32
    %c0_i32_1 = arith.constant 0 : i32
    return %c0_i32, %c0_i32_0 : i32, i32
  }
  func.func @transform_4(%arg0: i32, %arg1: i32) -> (i32, i32, i32) {
    %c0_i32 = arith.constant 0 : i32
    %c0_i32_0 = arith.constant 0 : i32
    return %arg0, %c0_i32, %arg1 : i32, i32, i32
  }
}

</mosaic_0001>

<llo_original>
// kernel: tpu_custom_call.1
$region0: #{tpu_custom_call.1}
  #allocation0 [shape = 'u32[]', space=smem, size = 0x4, offset = 0x4, fixed_abs, tag = 'smem constant byte address 0x4 - core index']
  #allocation1 [shape = 'u32[144,128]{1,0:T(1,128)}', space=vmem, size = 0x12000, scoped, tag = 'internal scratch']
  #allocation2 [shape = 'bf16[8,8,64]{2,1,0:T(8,128)(2,1)}', space=vmem, size = 0x4000, scoped, tag = 'scratch operand']
  %s0 = inlined_call_operand.vmem [shape: bf16[2,9,9,16], index: 0, kind: input, shape index: {}]
  %s1 = inlined_call_operand.vmem [shape: bf16[2,9,9,16], index: 1, kind: input, shape index: {}]
  %s2 = inlined_call_operand.vmem [shape: bf16[64,128], index: 2, kind: input, shape index: {}]
  %s3 = inlined_call_operand.vmem [shape: f32[1,128], index: 3, kind: input, shape index: {}]
  %s4 = inlined_call_operand.hbm [shape: f32[2,8,64], index: 4, kind: output, shape index: {}]
  %s5 = sld [smem:[#allocation0]]
  $region49: #{tpu_custom_call.1} parent=0
    _
  %s7 = ssub.s32 1, %s5
  %s8 = scalar_select 0, %s7, %s5
  $region1: #{tpu_custom_call.1} parent=0
    #allocation3 [shape = 'u8[8192]{0}', space=vmem, size = 0x2000, scoped, tag = 'output window, operand 0']
    #allocation4 [shape = 's32[2]{0}', space=sflag, size = 0x8, scoped, tag = 'scoped memory for tpu_custom_call.1']
    %9 = vsyncpa [#allocation4], 0
    %s10 = scalar_lea.sflag [#allocation4], 1
    %11 = vsyncpa %s10, 0
    loop: start=0, step=1, limit=4
    $region2: #{tpu_custom_call.1} parent=1 // loop_pre_header
      _
    $region3: #{tpu_custom_call.1} parent=1 // loop_header
      %s13 = sphi 0, %s17
      %p14 = scmp.ge.s32.totalorder %s13, 4
      %s20 = sphi 0, %s32
      %s21 = sphi 0, %s28
      %s22 = sphi 0, %s20
      %s23 = sphi 0, %s21
      %s24 = sphi 0, %s22
      %s25 = sphi 0, %s23
      %s37 = sphi 0, %s39
      %s40 = sphi 0, %s37
      %s41 = sphi 0, %s40
      %s57 = sphi 0, %s41
      %s69 = sphi 0, %s71
      %s72 = sphi 0, %s69
      %s73 = sphi 0, %s72
      %s89 = sphi 0, %s73
      %s93 = sphi 0, %s93
      %s95 = sphi 0, %s93
      %s96 = sphi 0, %s95
      %s110 = sphi 0, %s96
      %s114 = sphi 0, %s114
      %s116 = sphi 0, %s114
      %s117 = sphi 0, %s116
      %s131 = sphi 0, %s117
      %s139 = sphi 0, %s141
      %s142 = sphi 0, %s139
      %s143 = sphi 0, %s142
      %s159 = sphi 0, %s143
    $region4: #{tpu_custom_call.1} parent=1 // loop_header_branch
      %16 = sbr.rel (%p14) target = $region8
    $region5: #{tpu_custom_call.1} parent=1 // loop_body
      %s18 = ssub.s32 %s13, 1
      %s19 = ssub.s32 %s13, 2
      %s26 = sadd.s32 1, %s21
      %p27 = scmp.ge.s32.totalorder %s26, 1
      %s28 = scalar_select %p27, 0, %s26
      %s29 = sadd.s32 1, %s20
      %s30 = scalar_select %p27, %s29, %s20
      %p31 = scmp.ge.s32.totalorder %s30, 2
      %s32 = scalar_select %p31, 0, %s30
      %s33 = ssub.s32 %s20, %s32
      %s34 = ssub.s32 %s21, %s28
      %s35 = sor.u32 %s33, %s34
      %p36 = scmp.eq.s32.totalorder %s35, 0
      %s38 = sadd.s32 %s37, 1
      %s39 = scalar_select %p36, %s37, %s38
      %p42 = pneg %p36
      %p43 = scmp.eq.s32.totalorder %s13, 1
      %p44 = por %p42, %p43
      %p45 = scmp.ne.s32.totalorder %s37, %s40
      %p46 = scmp.eq.s32.totalorder %s13, 0
      %p47 = por %p45, %p46
      %p48 = scmp.ne.s32.totalorder %s37, %s40
      %p49 = scmp.eq.s32.totalorder %s18, 1
      %p50 = por %p48, %p49
      %p51 = scmp.ne.s32.totalorder %s40, %s41
      %p52 = scmp.eq.s32.totalorder %s18, 0
      %p53 = por %p51, %p52
      %p54 = scmp.ne.s32.totalorder %s40, %s41
      %p55 = scmp.eq.s32.totalorder %s19, 1
      %p56 = por %p54, %p55
      %p58 = scmp.ne.s32.totalorder %s41, %s57
      %p59 = scmp.eq.s32.totalorder %s19, 0
      %p60 = por %p58, %p59
      %s61 = sadd.s32 %s21, 1
      %s62 = smul.u32 %s61, 8
      %s63 = sadd.s32 %s28, 1
      %s64 = smul.u32 %s63, 8
      %s65 = ssub.s32 %s20, %s32
      %s66 = ssub.s32 %s62, %s64
      %s67 = sor.u32 %s65, %s66
      %p68 = scmp.eq.s32.totalorder %s67, 0
      %s70 = sadd.s32 %s69, 1
      %s71 = scalar_select %p68, %s69, %s70
      %p74 = pneg %p68
      %p75 = scmp.eq.s32.totalorder %s13, 1
      %p76 = por %p74, %p75
      %p77 = scmp.ne.s32.totalorder %s69, %s72
      %p78 = scmp.eq.s32.totalorder %s13, 0
      %p79 = por %p77, %p78
      %p80 = scmp.ne.s32.totalorder %s69, %s72
      %p81 = scmp.eq.s32.totalorder %s18, 1
      %p82 = por %p80, %p81
      %p83 = scmp.ne.s32.totalorder %s72, %s73
      %p84 = scmp.eq.s32.totalorder %s18, 0
      %p85 = por %p83, %p84
      %p86 = scmp.ne.s32.totalorder %s72, %s73
      %p87 = scmp.eq.s32.totalorder %s19, 1
      %p88 = por %p86, %p87
      %p90 = scmp.ne.s32.totalorder %s73, %s89
      %p91 = scmp.eq.s32.totalorder %s19, 0
      %p92 = por %p90, %p91
      %s94 = sadd.s32 %s93, 1
      %p97 = scmp.eq.s32.totalorder %s13, 1
      %p98 = scmp.ne.s32.totalorder %s93, %s95
      %p99 = scmp.eq.s32.totalorder %s13, 0
      %p100 = por %p98, %p99
      %p101 = scmp.ne.s32.totalorder %s93, %s95
      %p102 = scmp.eq.s32.totalorder %s18, 1
      %p103 = por %p101, %p102
      %p104 = scmp.ne.s32.totalorder %s95, %s96
      %p105 = scmp.eq.s32.totalorder %s18, 0
      %p106 = por %p104, %p105
      %p107 = scmp.ne.s32.totalorder %s95, %s96
      %p108 = scmp.eq.s32.totalorder %s19, 1
      %p109 = por %p107, %p108
      %p111 = scmp.ne.s32.totalorder %s96, %s110
      %p112 = scmp.eq.s32.totalorder %s19, 0
      %p113 = por %p111, %p112
      %s115 = sadd.s32 %s114, 1
      %p118 = scmp.eq.s32.totalorder %s13, 1
      %p119 = scmp.ne.s32.totalorder %s114, %s116
      %p120 = scmp.eq.s32.totalorder %s13, 0
      %p121 = por %p119, %p120
      %p122 = scmp.ne.s32.totalorder %s114, %s116
      %p123 = scmp.eq.s32.totalorder %s18, 1
      %p124 = por %p122, %p123
      %p125 = scmp.ne.s32.totalorder %s116, %s117
      %p126 = scmp.eq.s32.totalorder %s18, 0
      %p127 = por %p125, %p126
      %p128 = scmp.ne.s32.totalorder %s116, %s117
      %p129 = scmp.eq.s32.totalorder %s19, 1
      %p130 = por %p128, %p129
      %p132 = scmp.ne.s32.totalorder %s117, %s131
      %p133 = scmp.eq.s32.totalorder %s19, 0
      %p134 = por %p132, %p133
      %s135 = ssub.s32 %s20, %s32
      %s136 = ssub.s32 %s21, %s28
      %s137 = sor.u32 %s135, %s136
      %p138 = scmp.eq.s32.totalorder %s137, 0
      %s140 = sadd.s32 %s139, 1
      %s141 = scalar_select %p138, %s139, %s140
      %p144 = pneg %p138
      %p145 = scmp.eq.s32.totalorder %s13, 1
      %p146 = por %p144, %p145
      %p147 = scmp.ne.s32.totalorder %s139, %s142
      %p148 = scmp.eq.s32.totalorder %s13, 0
      %p149 = por %p147, %p148
      %p150 = scmp.ne.s32.totalorder %s139, %s142
      %p151 = scmp.eq.s32.totalorder %s18, 1
      %p152 = por %p150, %p151
      %p153 = scmp.ne.s32.totalorder %s142, %s143
      %p154 = scmp.eq.s32.totalorder %s18, 0
      %p155 = por %p153, %p154
      %p156 = scmp.ne.s32.totalorder %s142, %s143
      %p157 = scmp.eq.s32.totalorder %s19, 1
      %p158 = por %p156, %p157
      %p160 = scmp.ne.s32.totalorder %s143, %s159
      %p161 = scmp.eq.s32.totalorder %s19, 0
      %p162 = por %p160, %p161
      %p163 = scmp.le.s32.totalorder 1, %s13
      %p164 = scmp.lt.s32.totalorder %s13, 3
      %p165 = pnand %p163, %p164
      %p166 = pneg %p165
      // Predicated region
      $region9: #{tpu_custom_call.1} parent=5 // pred_check
        _
      $region10: #{tpu_custom_call.1} parent=5 // pred_check_branch
        %168 = sbr.rel (%p165) target = $region12
      $region11: #{tpu_custom_call.1} parent=5 // pred_region
        %s169 = ssub.s32 %s13, 1
        // Predicated region
        $region13: #{tpu_custom_call.1} parent=11 // pred_check
          %p170 = pneg %p106
        $region14: #{tpu_custom_call.1} parent=11 // pred_check_branch
          %172 = sbr.rel (%p170) target = $region16
        $region15: #{tpu_custom_call.1} parent=11 // pred_region
          _
        $region16: #{tpu_custom_call.1} parent=11 // pred_fallthru
          _
        // Predicated region
        $region17: #{tpu_custom_call.1} parent=11 // pred_check
          %p173 = pneg %p127
        $region18: #{tpu_custom_call.1} parent=11 // pred_check_branch
          %175 = sbr.rel (%p173) target = $region20
        $region19: #{tpu_custom_call.1} parent=11 // pred_region
          _
        $region20: #{tpu_custom_call.1} parent=11 // pred_fallthru
          _
      $region12: #{tpu_custom_call.1} parent=5 // pred_fallthru
        _
      %p176 = scmp.lt.s32.totalorder %s13, 2
      // Predicated region
      $region21: #{tpu_custom_call.1} parent=5 // pred_check
        %p177 = pneg %p176
      $region22: #{tpu_custom_call.1} parent=5 // pred_check_branch
        %179 = sbr.rel (%p177) target = $region24
      $region23: #{tpu_custom_call.1} parent=5 // pred_region
        // Predicated region
        $region25: #{tpu_custom_call.1} parent=23 // pred_check
          %p180 = pneg %p47
        $region26: #{tpu_custom_call.1} parent=23 // pred_check_branch
          %182 = sbr.rel (%p180) target = $region28
        $region27: #{tpu_custom_call.1} parent=23 // pred_region
          %s183 = smul.u32 8, %s21
          %s184 = ssub.s32 9, %s183
          %p185 = scmp.lt.s32.totalorder %s184, 8
          %s186 = scalar_select %p185, %s184, 8
          %s187 = smul.u32 64, %s186
          %s188 = smul.u32 %s187, 2
          %p189 = scmp.lt.s32.totalorder %s20, 1
          %s190 = scalar_select %p189, %s20, 1
          %p191 = scmp.lt.s32.totalorder %s183, 8
          %s192 = scalar_select %p191, %s183, 8
          %s193 = smul.addr %s192, 2
          %s194 = smul.addr %s190, 18
          %s195 = sadd.s32 %s193, %s194
          %s196 = smul.addr %s195, 4
          %s197 = scalar_lea.vmem %s0, %s196
          %s198 = smul.u32 8, %s21
          %s199 = ssub.s32 9, %s198
          %p200 = scmp.lt.s32.totalorder %s199, 8
          %s201 = scalar_select %p200, %s199, 8
          %s202 = smul.u32 64, %s201
          %s203 = smul.u32 %s202, 2
        $region28: #{tpu_custom_call.1} parent=23 // pred_fallthru
          _
        // Predicated region
        $region29: #{tpu_custom_call.1} parent=23 // pred_check
          %p204 = pneg %p79
        $region30: #{tpu_custom_call.1} parent=23 // pred_check_branch
          %206 = sbr.rel (%p204) target = $region32
        $region31: #{tpu_custom_call.1} parent=23 // pred_region
          %s207 = sadd.s32 %s21, 1
          %s208 = smul.u32 %s207, 8
          %p209 = scmp.lt.s32.totalorder %s20, 1
          %s210 = scalar_select %p209, %s20, 1
          %p211 = scmp.lt.s32.totalorder %s208, 8
          %s212 = scalar_select %p211, %s208, 8
          %s213 = smul.addr %s212, 2
          %s214 = smul.addr %s210, 18
          %s215 = sadd.s32 %s213, %s214
          %s216 = smul.addr %s215, 4
          %s217 = scalar_lea.vmem %s1, %s216
          %s218 = sadd.s32 %s21, 1
          %s219 = smul.u32 %s218, 8
        $region32: #{tpu_custom_call.1} parent=23 // pred_fallthru
          _
      $region24: #{tpu_custom_call.1} parent=5 // pred_fallthru
        _
      %p220 = scmp.le.s32.totalorder 1, %s13
      %p221 = scmp.lt.s32.totalorder %s13, 3
      %p222 = pnand %p220, %p221
      %p223 = pneg %p222
      // Predicated region
      $region33: #{tpu_custom_call.1} parent=5 // pred_check
        _
      $region34: #{tpu_custom_call.1} parent=5 // pred_check_branch
        %225 = sbr.rel (%p222) target = $region36
      $region35: #{tpu_custom_call.1} parent=5 // pred_region
        %s226 = ssub.s32 %s13, 1
        %s227 = smul.u32 8, %s23
        %s228 = ssub.s32 9, %s227
        %p229 = scmp.lt.s32.totalorder %s228, 8
        %s230 = scalar_select %p229, %s228, 8
        %s231 = smul.u32 64, %s230
        %s232 = smul.u32 %s231, 2
        %p233 = scmp.lt.s32.totalorder %s22, 1
        %s234 = scalar_select %p233, %s22, 1
        %p235 = scmp.lt.s32.totalorder %s227, 8
        %s236 = scalar_select %p235, %s227, 8
        %s237 = smul.addr %s236, 2
        %s238 = smul.addr %s234, 18
        %s239 = sadd.s32 %s237, %s238
        %s240 = smul.addr %s239, 4
        %s241 = scalar_lea.vmem %s0, %s240
        %p242 = pneg %p53
        %p243 = pneg %p50
        %s244 = sadd.s32 %s23, 1
        %s245 = smul.u32 %s244, 8
        %p246 = scmp.lt.s32.totalorder %s22, 1
        %s247 = scalar_select %p246, %s22, 1
        %p248 = scmp.lt.s32.totalorder %s245, 8
        %s249 = scalar_select %p248, %s245, 8
        %s250 = smul.addr %s249, 2
        %s251 = smul.addr %s247, 18
        %s252 = sadd.s32 %s250, %s251
        %s253 = smul.addr %s252, 4
        %s254 = scalar_lea.vmem %s1, %s253
        %p255 = pneg %p85
        %p256 = pneg %p82
        %p257 = pneg %p106
        %p258 = pneg %p103
        %p259 = pneg %p127
        %p260 = pneg %p124
        %p261 = pneg %p155
        %p262 = pneg %p152
        %s263 = sand.u32 %s142, 1
        %s264 = scalar_lea.sflag [#allocation4], %s263
        %s265 = sand.u32 %s142, 1
        %s266 = smul.addr %s265, 8
        %s267 = scalar_lea.vmem [#allocation3], %s266
        %s268 = smul.u32 8, %s23
        %s269 = ssub.s32 9, %s268
        %p270 = scmp.lt.s32.totalorder %s269, 8
        %s271 = scalar_select %p270, %s269, 8
        %s272 = smul.u32 64, %s271
        %s273 = smul.u32 %s272, 2
        %p274 = scmp.lt.s32.totalorder %s22, 1
        %s275 = scalar_select %p274, %s22, 1
        %p276 = scmp.lt.s32.totalorder %s268, 8
        %s277 = scalar_select %p276, %s268, 8
        %s278 = smul.addr %s277, 2
        %s279 = smul.addr %s275, 18
        %s280 = sadd.s32 %s278, %s279
        %s281 = smul.addr %s280, 4
        %s282 = scalar_lea.vmem %s0, %s281
        %s283 = smul.u32 8, %s23
        %s284 = ssub.s32 9, %s283
        %p285 = scmp.lt.s32.totalorder %s284, 8
        %s286 = scalar_select %p285, %s284, 8
        %s287 = smul.u32 64, %s286
        %s288 = smul.u32 %s287, 2
        %s289 = sadd.s32 %s23, 1
        %s290 = smul.u32 %s289, 8
        %p291 = scmp.lt.s32.totalorder %s22, 1
        %s292 = scalar_select %p291, %s22, 1
        %p293 = scmp.lt.s32.totalorder %s290, 8
        %s294 = scalar_select %p293, %s290, 8
        %s295 = smul.addr %s294, 2
        %s296 = smul.addr %s292, 18
        %s297 = sadd.s32 %s295, %s296
        %s298 = smul.addr %s297, 4
        %s299 = scalar_lea.vmem %s1, %s298
        %s300 = sadd.s32 %s23, 1
        %s301 = smul.u32 %s300, 8
        %v303 = vld [vmem:[%s282] sm:$0xf]
        %v304 = vld [vmem:[%s282 + $0x8] sm:$0xf]
        %v305 = vld [vmem:[%s282 + $0x10] sm:$0xf]
        %v306 = vld [vmem:[%s282 + $0x18] sm:$0xf]
        %v307 = vld [vmem:[%s282 + $0x20] sm:$0xf]
        %v308 = vld [vmem:[%s282 + $0x28] sm:$0xf]
        %v309 = vld [vmem:[%s282 + $0x30] sm:$0xf]
        %v310 = vld [vmem:[%s282 + $0x38] sm:$0xf]
        %vm311 = vcmask 125952
        %312 = vst.msk [vmem:[#allocation2] sm:$0xf] %vm311, %v303
        %313 = vst.msk [vmem:[#allocation2 + $0x4] sm:$0xf] %vm311, %v304
        %314 = vst.msk [vmem:[#allocation2 + $0x8] sm:$0xf] %vm311, %v305
        %315 = vst.msk [vmem:[#allocation2 + $0xc] sm:$0xf] %vm311, %v306
        %316 = vst.msk [vmem:[#allocation2 + $0x10] sm:$0xf] %vm311, %v307
        %317 = vst.msk [vmem:[#allocation2 + $0x14] sm:$0xf] %vm311, %v308
        %318 = vst.msk [vmem:[#allocation2 + $0x18] sm:$0xf] %vm311, %v309
        %319 = vst.msk [vmem:[#allocation2 + $0x1c] sm:$0xf] %vm311, %v310
        %v320 = vld [vmem:[%s282] sm:$0xf]
        %v321 = vld [vmem:[%s282 + $0x4] sm:$0x1]
        %v322 = vld [vmem:[%s282 + $0x8] sm:$0xf]
        %v323 = vld [vmem:[%s282 + $0xc] sm:$0x1]
        %v324 = vld [vmem:[%s282 + $0x10] sm:$0xf]
        %v325 = vld [vmem:[%s282 + $0x14] sm:$0x1]
        %v326 = vld [vmem:[%s282 + $0x18] sm:$0xf]
        %v327 = vld [vmem:[%s282 + $0x1c] sm:$0x1]
        %v328 = vld [vmem:[%s282 + $0x20] sm:$0xf]
        %v329 = vld [vmem:[%s282 + $0x24] sm:$0x1]
        %v330 = vld [vmem:[%s282 + $0x28] sm:$0xf]
        %v331 = vld [vmem:[%s282 + $0x2c] sm:$0x1]
        %v332 = vld [vmem:[%s282 + $0x30] sm:$0xf]
        %v333 = vld [vmem:[%s282 + $0x34] sm:$0x1]
        %v334 = vld [vmem:[%s282 + $0x38] sm:$0xf]
        %v335 = vld [vmem:[%s282 + $0x3c] sm:$0x1]
        %vm336 = vsmask.f32 3328
        %vm337 = vsmask.f32 7440
        %vm338 = vmor %vm336, %vm337
        %v340 = vshrl.u32 %v320, 16
        %v342 = vrot.slane %v340, 4
        %v343 = vshll.u32 %v320, 16
        %v345 = vrot.slane %v343, 5
        %v346 = vor.u32 %v342, %v345
        %v347 = vrot.slane %v346, 4
        %v349 = vshll.u32 %v321, 16
        %v351 = vrot.slane %v349, 5
        %v352 = vsel %vm338, %v347, %v351
        %v354 = vshrl.u32 %v322, 16
        %v356 = vrot.slane %v354, 4
        %v357 = vshll.u32 %v322, 16
        %v359 = vrot.slane %v357, 5
        %v360 = vor.u32 %v356, %v359
        %v361 = vrot.slane %v360, 4
        %v363 = vshll.u32 %v323, 16
        %v365 = vrot.slane %v363, 5
        %v366 = vsel %vm338, %v361, %v365
        %v368 = vshrl.u32 %v324, 16
        %v370 = vrot.slane %v368, 4
        %v371 = vshll.u32 %v324, 16
        %v373 = vrot.slane %v371, 5
        %v374 = vor.u32 %v370, %v373
        %v375 = vrot.slane %v374, 4
        %v377 = vshll.u32 %v325, 16
        %v379 = vrot.slane %v377, 5
        %v380 = vsel %vm338, %v375, %v379
        %v382 = vshrl.u32 %v326, 16
        %v384 = vrot.slane %v382, 4
        %v385 = vshll.u32 %v326, 16
        %v387 = vrot.slane %v385, 5
        %v388 = vor.u32 %v384, %v387
        %v389 = vrot.slane %v388, 4
        %v391 = vshll.u32 %v327, 16
        %v393 = vrot.slane %v391, 5
        %v394 = vsel %vm338, %v389, %v393
        %v396 = vshrl.u32 %v328, 16
        %v398 = vrot.slane %v396, 4
        %v399 = vshll.u32 %v328, 16
        %v401 = vrot.slane %v399, 5
        %v402 = vor.u32 %v398, %v401
        %v403 = vrot.slane %v402, 4
        %v405 = vshll.u32 %v329, 16
        %v407 = vrot.slane %v405, 5
        %v408 = vsel %vm338, %v403, %v407
        %v410 = vshrl.u32 %v330, 16
        %v412 = vrot.slane %v410, 4
        %v413 = vshll.u32 %v330, 16
        %v415 = vrot.slane %v413, 5
        %v416 = vor.u32 %v412, %v415
        %v417 = vrot.slane %v416, 4
        %v419 = vshll.u32 %v331, 16
        %v421 = vrot.slane %v419, 5
        %v422 = vsel %vm338, %v417, %v421
        %v424 = vshrl.u32 %v332, 16
        %v426 = vrot.slane %v424, 4
        %v427 = vshll.u32 %v332, 16
        %v429 = vrot.slane %v427, 5
        %v430 = vor.u32 %v426, %v429
        %v431 = vrot.slane %v430, 4
        %v433 = vshll.u32 %v333, 16
        %v435 = vrot.slane %v433, 5
        %v436 = vsel %vm338, %v431, %v435
        %v438 = vshrl.u32 %v334, 16
        %v440 = vrot.slane %v438, 4
        %v441 = vshll.u32 %v334, 16
        %v443 = vrot.slane %v441, 5
        %v444 = vor.u32 %v440, %v443
        %v445 = vrot.slane %v444, 4
        %v447 = vshll.u32 %v335, 16
        %v449 = vrot.slane %v447, 5
        %v450 = vsel %vm338, %v445, %v449
        %451 = vrot.lane.b32.xlu0 %v352, 16
        %v452 = vpop.permute.xlu0 %451
        %453 = vrot.lane.b32.xlu0 %v366, 16
        %v454 = vpop.permute.xlu0 %453
        %455 = vrot.lane.b32.xlu0 %v380, 16
        %v456 = vpop.permute.xlu0 %455
        %457 = vrot.lane.b32.xlu0 %v394, 16
        %v458 = vpop.permute.xlu0 %457
        %459 = vrot.lane.b32.xlu0 %v408, 16
        %v460 = vpop.permute.xlu0 %459
        %461 = vrot.lane.b32.xlu0 %v422, 16
        %v462 = vpop.permute.xlu0 %461
        %463 = vrot.lane.b32.xlu0 %v436, 16
        %v464 = vpop.permute.xlu0 %463
        %465 = vrot.lane.b32.xlu0 %v450, 16
        %v466 = vpop.permute.xlu0 %465
        %vm475 = vcmask 257152
        %476 = vst.msk [vmem:[#allocation2] sm:$0xf] %vm475, %v452
        %477 = vst.msk [vmem:[#allocation2 + $0x4] sm:$0xf] %vm475, %v454
        %478 = vst.msk [vmem:[#allocation2 + $0x8] sm:$0xf] %vm475, %v456
        %479 = vst.msk [vmem:[#allocation2 + $0xc] sm:$0xf] %vm475, %v458
        %480 = vst.msk [vmem:[#allocation2 + $0x10] sm:$0xf] %vm475, %v460
        %481 = vst.msk [vmem:[#allocation2 + $0x14] sm:$0xf] %vm475, %v462
        %482 = vst.msk [vmem:[#allocation2 + $0x18] sm:$0xf] %vm475, %v464
        %483 = vst.msk [vmem:[#allocation2 + $0x1c] sm:$0xf] %vm475, %v466
        %s484 = scalar_lea.vmem %s282, 8
        %v485 = vld [vmem:[%s484] sm:$0xf]
        %v486 = vld [vmem:[%s484 + $0x8] sm:$0xf]
        %v487 = vld [vmem:[%s484 + $0x10] sm:$0xf]
        %v488 = vld [vmem:[%s484 + $0x18] sm:$0xf]
        %v489 = vld [vmem:[%s484 + $0x20] sm:$0xf]
        %v490 = vld [vmem:[%s484 + $0x28] sm:$0xf]
        %v491 = vld [vmem:[%s484 + $0x30] sm:$0xf]
        %499 = vrot.lane.b32.xlu0 %v485, 32
        %v500 = vpop.permute.xlu0 %499
        %501 = vrot.lane.b32.xlu0 %v486, 32
        %v502 = vpop.permute.xlu0 %501
        %503 = vrot.lane.b32.xlu0 %v487, 32
        %v504 = vpop.permute.xlu0 %503
        %505 = vrot.lane.b32.xlu0 %v488, 32
        %v506 = vpop.permute.xlu0 %505
        %507 = vrot.lane.b32.xlu0 %v489, 32
        %v508 = vpop.permute.xlu0 %507
        %509 = vrot.lane.b32.xlu0 %v490, 32
        %v510 = vpop.permute.xlu0 %509
        %511 = vrot.lane.b32.xlu0 %v491, 32
        %v512 = vpop.permute.xlu0 %511
        %vm520 = vcmask 388352
        %521 = vst.msk [vmem:[#allocation2] sm:$0xf] %vm520, %v500
        %522 = vst.msk [vmem:[#allocation2 + $0x4] sm:$0xf] %vm520, %v502
        %523 = vst.msk [vmem:[#allocation2 + $0x8] sm:$0xf] %vm520, %v504
        %524 = vst.msk [vmem:[#allocation2 + $0xc] sm:$0xf] %vm520, %v506
        %525 = vst.msk [vmem:[#allocation2 + $0x10] sm:$0xf] %vm520, %v508
        %526 = vst.msk [vmem:[#allocation2 + $0x14] sm:$0xf] %vm520, %v510
        %527 = vst.msk [vmem:[#allocation2 + $0x18] sm:$0xf] %vm520, %v512
        %v528 = vld [vmem:[%s299] sm:$0xf]
        %530 = vrot.lane.b32.xlu0 %v528, 32
        %v531 = vpop.permute.xlu0 %530
        %s533 = scalar_lea.vmem [#allocation2], 28
        %534 = vst.msk [vmem:[%s533] sm:$0xf] %vm520, %v531
        %v535 = vld [vmem:[%s484] sm:$0xf]
        %v536 = vld [vmem:[%s484 + $0x4] sm:$0x1]
        %v537 = vld [vmem:[%s484 + $0x8] sm:$0xf]
        %v538 = vld [vmem:[%s484 + $0xc] sm:$0x1]
        %v539 = vld [vmem:[%s484 + $0x10] sm:$0xf]
        %v540 = vld [vmem:[%s484 + $0x14] sm:$0x1]
        %v541 = vld [vmem:[%s484 + $0x18] sm:$0xf]
        %v542 = vld [vmem:[%s484 + $0x1c] sm:$0x1]
        %v543 = vld [vmem:[%s484 + $0x20] sm:$0xf]
        %v544 = vld [vmem:[%s484 + $0x24] sm:$0x1]
        %v545 = vld [vmem:[%s484 + $0x28] sm:$0xf]
        %v546 = vld [vmem:[%s484 + $0x2c] sm:$0x1]
        %v547 = vld [vmem:[%s484 + $0x30] sm:$0xf]
        %v548 = vld [vmem:[%s484 + $0x34] sm:$0x1]
        %v550 = vshrl.u32 %v535, 16
        %v552 = vrot.slane %v550, 4
        %v553 = vshll.u32 %v535, 16
        %v555 = vrot.slane %v553, 5
        %v556 = vor.u32 %v552, %v555
        %v557 = vrot.slane %v556, 4
        %v559 = vshll.u32 %v536, 16
        %v561 = vrot.slane %v559, 5
        %v562 = vsel %vm338, %v557, %v561
        %v564 = vshrl.u32 %v537, 16
        %v566 = vrot.slane %v564, 4
        %v567 = vshll.u32 %v537, 16
        %v569 = vrot.slane %v567, 5
        %v570 = vor.u32 %v566, %v569
        %v571 = vrot.slane %v570, 4
        %v573 = vshll.u32 %v538, 16
        %v575 = vrot.slane %v573, 5
        %v576 = vsel %vm338, %v571, %v575
        %v578 = vshrl.u32 %v539, 16
        %v580 = vrot.slane %v578, 4
        %v581 = vshll.u32 %v539, 16
        %v583 = vrot.slane %v581, 5
        %v584 = vor.u32 %v580, %v583
        %v585 = vrot.slane %v584, 4
        %v587 = vshll.u32 %v540, 16
        %v589 = vrot.slane %v587, 5
        %v590 = vsel %vm338, %v585, %v589
        %v592 = vshrl.u32 %v541, 16
        %v594 = vrot.slane %v592, 4
        %v595 = vshll.u32 %v541, 16
        %v597 = vrot.slane %v595, 5
        %v598 = vor.u32 %v594, %v597
        %v599 = vrot.slane %v598, 4
        %v601 = vshll.u32 %v542, 16
        %v603 = vrot.slane %v601, 5
        %v604 = vsel %vm338, %v599, %v603
        %v606 = vshrl.u32 %v543, 16
        %v608 = vrot.slane %v606, 4
        %v609 = vshll.u32 %v543, 16
        %v611 = vrot.slane %v609, 5
        %v612 = vor.u32 %v608, %v611
        %v613 = vrot.slane %v612, 4
        %v615 = vshll.u32 %v544, 16
        %v617 = vrot.slane %v615, 5
        %v618 = vsel %vm338, %v613, %v617
        %v620 = vshrl.u32 %v545, 16
        %v622 = vrot.slane %v620, 4
        %v623 = vshll.u32 %v545, 16
        %v625 = vrot.slane %v623, 5
        %v626 = vor.u32 %v622, %v625
        %v627 = vrot.slane %v626, 4
        %v629 = vshll.u32 %v546, 16
        %v631 = vrot.slane %v629, 5
        %v632 = vsel %vm338, %v627, %v631
        %v634 = vshrl.u32 %v547, 16
        %v636 = vrot.slane %v634, 4
        %v637 = vshll.u32 %v547, 16
        %v639 = vrot.slane %v637, 5
        %v640 = vor.u32 %v636, %v639
        %v641 = vrot.slane %v640, 4
        %v643 = vshll.u32 %v548, 16
        %v645 = vrot.slane %v643, 5
        %v646 = vsel %vm338, %v641, %v645
        %647 = vrot.lane.b32.xlu0 %v562, 48
        %v648 = vpop.permute.xlu0 %647
        %649 = vrot.lane.b32.xlu0 %v576, 48
        %v650 = vpop.permute.xlu0 %649
        %651 = vrot.lane.b32.xlu0 %v590, 48
        %v652 = vpop.permute.xlu0 %651
        %653 = vrot.lane.b32.xlu0 %v604, 48
        %v654 = vpop.permute.xlu0 %653
        %655 = vrot.lane.b32.xlu0 %v618, 48
        %v656 = vpop.permute.xlu0 %655
        %657 = vrot.lane.b32.xlu0 %v632, 48
        %v658 = vpop.permute.xlu0 %657
        %659 = vrot.lane.b32.xlu0 %v646, 48
        %v660 = vpop.permute.xlu0 %659
        %vm668 = vcmask 519552
        %669 = vst.msk [vmem:[#allocation2] sm:$0xf] %vm668, %v648
        %670 = vst.msk [vmem:[#allocation2 + $0x4] sm:$0xf] %vm668, %v650
        %671 = vst.msk [vmem:[#allocation2 + $0x8] sm:$0xf] %vm668, %v652
        %672 = vst.msk [vmem:[#allocation2 + $0xc] sm:$0xf] %vm668, %v654
        %673 = vst.msk [vmem:[#allocation2 + $0x10] sm:$0xf] %vm668, %v656
        %674 = vst.msk [vmem:[#allocation2 + $0x14] sm:$0xf] %vm668, %v658
        %675 = vst.msk [vmem:[#allocation2 + $0x18] sm:$0xf] %vm668, %v660
        %v676 = vld [vmem:[%s299] sm:$0xf]
        %v677 = vld [vmem:[%s299 + $0x4] sm:$0x1]
        %v679 = vshrl.u32 %v676, 16
        %v681 = vrot.slane %v679, 4
        %v682 = vshll.u32 %v676, 16
        %v684 = vrot.slane %v682, 5
        %v685 = vor.u32 %v681, %v684
        %v686 = vrot.slane %v685, 4
        %v688 = vshll.u32 %v677, 16
        %v690 = vrot.slane %v688, 5
        %v691 = vsel %vm338, %v686, %v690
        %692 = vrot.lane.b32.xlu0 %v691, 48
        %v693 = vpop.permute.xlu0 %692
        %695 = vst.msk [vmem:[%s533] sm:$0xf] %vm668, %v693
        %v696 = vld [vmem:[#allocation2] sm:$0xf]
        %v697 = vld [vmem:[#allocation2 + $0x4] sm:$0xf]
        %v698 = vld [vmem:[#allocation2 + $0x8] sm:$0xf]
        %v699 = vld [vmem:[#allocation2 + $0xc] sm:$0xf]
        %v700 = vld [vmem:[#allocation2 + $0x10] sm:$0xf]
        %v701 = vld [vmem:[#allocation2 + $0x14] sm:$0xf]
        %v702 = vld [vmem:[#allocation2 + $0x18] sm:$0xf]
        %v703 = vld [vmem:[#allocation2 + $0x1c] sm:$0xf]
        %v704 = vld [vmem:[%s2] sm:$0xf]
        %v705 = vld [vmem:[%s2 + $0x4] sm:$0xf]
        %v706 = vld [vmem:[%s2 + $0x8] sm:$0xf]
        %v707 = vld [vmem:[%s2 + $0xc] sm:$0xf]
        %v708 = vld [vmem:[%s2 + $0x10] sm:$0xf]
        %v709 = vld [vmem:[%s2 + $0x14] sm:$0xf]
        %v710 = vld [vmem:[%s2 + $0x18] sm:$0xf]
        %v711 = vld [vmem:[%s2 + $0x1c] sm:$0xf]
        %v712 = vld [vmem:[%s3] sm:$0x1]
        %v714 = vlaneseq
        %v715 = vshrl.u32 %v714, 7
        %v716 = vsub.s32 0, %v715
        %v717 = vrot.slane %v712, %v716
        %v727 = vunpack.c.l.b16 %v696
        %v728 = vunpack.c.l.b16 %v697
        %v729 = vunpack.c.l.b16 %v698
        %v730 = vunpack.c.l.b16 %v699
        %v731 = vunpack.c.l.b16 %v700
        %v732 = vunpack.c.l.b16 %v701
        %v733 = vunpack.c.l.b16 %v702
        %v734 = vunpack.c.l.b16 %v703
        %v735 = vpack.c.b16 %v728, %v727
        %v736 = vpack.c.b16 %v730, %v729
        %v737 = vpack.c.b16 %v732, %v731
        %v738 = vpack.c.b16 %v734, %v733
        %v747 = vunpack.c.l.b16 %v704
        %v748 = vunpack.c.l.b16 %v705
        %v749 = vunpack.c.l.b16 %v706
        %v750 = vunpack.c.l.b16 %v707
        %v751 = vunpack.c.l.b16 %v708
        %v752 = vunpack.c.l.b16 %v709
        %v753 = vunpack.c.l.b16 %v710
        %v754 = vunpack.c.l.b16 %v711
        %v755 = vpack.c.b16 %v748, %v747
        %v756 = vpack.c.b16 %v750, %v749
        %v757 = vpack.c.b16 %v752, %v751
        %v758 = vpack.c.b16 %v754, %v753
        %vm763 = vcmask 523264
        %v765 = vsel %vm763, %v735, 0
        %v768 = vsel %vm763, %v736, 0
        %v771 = vsel %vm763, %v737, 0
        %v774 = vsel %vm763, %v738, 0
        %776 = vmatprep.subr.bf16.mxu0 0
        %777 = vmatpush1.bf16.msra.mxu0 %v755
        %778 = vmatprep.subr.bf16.mxu0 0
        %779 = vmatpush1.bf16.msra.mxu0 %v756
        %780 = vmatprep.subr.bf16.mxu0 0
        %781 = vmatpush1.bf16.msra.mxu0 %v757
        %782 = vmatprep.subr.bf16.mxu0 0
        %783 = vmatpush1.bf16.msra.mxu0 %v758
        %784 = vmatprep.subr.bf16.mxu0 0
        %785 = vmatpush1.bf16.msra.mxu0 0
        %786 = vmatprep.subr.bf16.mxu0 0
        %787 = vmatpush1.bf16.msra.mxu0 0
        %788 = vmatprep.subr.bf16.mxu0 0
        %789 = vmatpush1.bf16.msra.mxu0 0
        %790 = vmatprep.subr.bf16.mxu0 0
        %791 = vmatpush1.bf16.msra.mxu0 0
        %792 = vmatprep.subr.bf16.mxu0 0
        %793 = vmatpush1.bf16.msra.mxu0 0
        %794 = vmatprep.subr.bf16.mxu0 0
        %795 = vmatpush1.bf16.msra.mxu0 0
        %796 = vmatprep.subr.bf16.mxu0 0
        %797 = vmatpush1.bf16.msra.mxu0 0
        %798 = vmatprep.subr.bf16.mxu0 0
        %799 = vmatpush1.bf16.msra.mxu0 0
        %800 = vmatprep.subr.bf16.mxu0 0
        %801 = vmatpush1.bf16.msra.mxu0 0
        %802 = vmatprep.subr.bf16.mxu0 0
        %803 = vmatpush1.bf16.msra.mxu0 0
        %804 = vmatprep.subr.bf16.mxu0 0
        %805 = vmatpush1.bf16.msra.mxu0 0
        %806 = vmatprep.subr.bf16.mxu0 0
        %807 = vmatpush1.bf16.msra.mxu0 0
        %808 = vmatprep.mubr.bf16.mxu0 0
        %809 = vmatmul.mubr.bf16.gmra.mrb[0].mxu0 %v765
        %v810 = vpop.f32.mrb[0].mxu0
        %v811 = vadd.f32 %v717, %v810
        %v812 = vpop.f32.mrb[0].mxu0
        %v813 = vpop.f32.mrb[0].mxu0
        %v814 = vadd.f32 %v717, %v813
        %v815 = vpop.f32.mrb[0].mxu0
        %816 = vmatprep.mubr.bf16.mxu0 0
        %817 = vmatmul.mubr.bf16.gmra.mrb[0].mxu0 %v768
        %v818 = vpop.f32.mrb[0].mxu0
        %v819 = vadd.f32 %v717, %v818
        %v820 = vpop.f32.mrb[0].mxu0
        %v821 = vpop.f32.mrb[0].mxu0
        %v822 = vadd.f32 %v717, %v821
        %v823 = vpop.f32.mrb[0].mxu0
        %824 = vmatprep.mubr.bf16.mxu0 0
        %825 = vmatmul.mubr.bf16.gmra.mrb[0].mxu0 %v771
        %v826 = vpop.f32.mrb[0].mxu0
        %v827 = vadd.f32 %v717, %v826
        %v828 = vpop.f32.mrb[0].mxu0
        %v829 = vpop.f32.mrb[0].mxu0
        %v830 = vadd.f32 %v717, %v829
        %v831 = vpop.f32.mrb[0].mxu0
        %832 = vmatprep.mubr.bf16.mxu0 0
        %833 = vmatmul.mubr.bf16.gmra.mrb[0].mxu0 %v774
        %v834 = vpop.f32.mrb[0].mxu0
        %v835 = vadd.f32 %v717, %v834
        %v836 = vpop.f32.mrb[0].mxu0
        %v837 = vpop.f32.mrb[0].mxu0
        %v838 = vadd.f32 %v717, %v837
        %v839 = vpop.f32.mrb[0].mxu0
        %840 = vdwg.mxu0
        %vm841 = vcmp.gt.f32.partialorder %v811, 0.0
        %vm842 = vcmp.gt.f32.partialorder %v814, 0.0
        %vm843 = vcmp.gt.f32.partialorder %v819, 0.0
        %vm844 = vcmp.gt.f32.partialorder %v822, 0.0
        %vm845 = vcmp.gt.f32.partialorder %v827, 0.0
        %vm846 = vcmp.gt.f32.partialorder %v830, 0.0
        %vm847 = vcmp.gt.f32.partialorder %v835, 0.0
        %vm848 = vcmp.gt.f32.partialorder %v838, 0.0
        %v849 = vmul.f32 %v811, 0.2
        %v850 = vmul.f32 %v814, 0.2
        %v851 = vmul.f32 %v819, 0.2
        %v852 = vmul.f32 %v822, 0.2
        %v853 = vmul.f32 %v827, 0.2
        %v854 = vmul.f32 %v830, 0.2
        %v855 = vmul.f32 %v835, 0.2
        %v856 = vmul.f32 %v838, 0.2
        %v857 = vsel %vm841, %v811, %v849
        %v858 = vsel %vm842, %v814, %v850
        %v859 = vsel %vm843, %v819, %v851
        %v860 = vsel %vm844, %v822, %v852
        %v861 = vsel %vm845, %v827, %v853
        %v862 = vsel %vm846, %v830, %v854
        %v863 = vsel %vm847, %v835, %v855
        %v864 = vsel %vm848, %v838, %v856
        %865 = vxpose.xlu0.b32.start [1/16] %v857, 128
        %866 = vxpose.xlu0.b32.cont [2/16] %v858, 128
        %867 = vxpose.xlu0.b32.cont [3/16] %v859, 128
        %868 = vxpose.xlu0.b32.cont [4/16] %v860, 128
        %869 = vxpose.xlu0.b32.cont [5/16] %v861, 128
        %870 = vxpose.xlu0.b32.cont [6/16] %v862, 128
        %871 = vxpose.xlu0.b32.cont [7/16] %v863, 128
        %872 = vxpose.xlu0.b32.cont [8/16] %v864, 128
        %873 = vxpose.xlu0.b32.cont [9/16] 0.0, 128
        %874 = vxpose.xlu0.b32.cont [10/16] 0.0, 128
        %875 = vxpose.xlu0.b32.cont [11/16] 0.0, 128
        %876 = vxpose.xlu0.b32.cont [12/16] 0.0, 128
        %877 = vxpose.xlu0.b32.cont [13/16] 0.0, 128
        %878 = vxpose.xlu0.b32.cont [14/16] 0.0, 128
        %879 = vxpose.xlu0.b32.cont [15/16] 0.0, 128
        %880 = vxpose.xlu0.b32.end [16/16] 0.0, 128
        %v881 = vpop.trf.xlu0
        %v882 = vpop.trf.xlu0
        %v883 = vpop.trf.xlu0
        %v884 = vpop.trf.xlu0
        %v885 = vpop.trf.xlu0
        %v886 = vpop.trf.xlu0
        %v887 = vpop.trf.xlu0
        %v888 = vpop.trf.xlu0
        %v889 = vpop.trf.xlu0
        %v890 = vpop.trf.xlu0
        %v891 = vpop.trf.xlu0
        %v892 = vpop.trf.xlu0
        %v893 = vpop.trf.xlu0
        %v894 = vpop.trf.xlu0
        %v895 = vpop.trf.xlu0
        %v896 = vpop.trf.xlu0
        %897 = vst.msk [vmem:[%s267] sm:$0xff] %vm763, %v881
        %s898 = sand.u32 %s142, 1
        %s899 = scalar_lea.sflag [#allocation4], %s898
        %s900 = sand.u32 %s142, 1
        %s901 = smul.addr %s900, 8
        %s902 = scalar_lea.vmem [#allocation3], %s901
        // Predicated region
        $region37: #{tpu_custom_call.1} parent=35 // pred_check
          %p903 = pneg %p152
        $region38: #{tpu_custom_call.1} parent=35 // pred_check_branch
          %905 = sbr.rel (%p903) target = $region40
        $region39: #{tpu_custom_call.1} parent=35 // pred_region
          %s907 = ssub.s32 128, 128
          %908 = vsyncadd %s899, %s907
          %s909 = sadd.s32 %s23, %s22
          %s910 = smul.addr %s909, 128
          %s911 = scalar_lea.hbm %s4, %s910
          %s913 = sshll.u32 %s902, 4
          %s914 = int_to_ptr.vmem [resolvable:$true] %s913
          %916 = dma.vmem_to_hbm [thread:$0]  %s914, 128, %s911, %s899
        $region40: #{tpu_custom_call.1} parent=35 // pred_fallthru
          _
      $region36: #{tpu_custom_call.1} parent=5 // pred_fallthru
        _
      %p917 = scmp.le.s32.totalorder 2, %s13
      // Predicated region
      $region41: #{tpu_custom_call.1} parent=5 // pred_check
        %p918 = pneg %p917
      $region42: #{tpu_custom_call.1} parent=5 // pred_check_branch
        %920 = sbr.rel (%p918) target = $region44
      $region43: #{tpu_custom_call.1} parent=5 // pred_region
        %s921 = ssub.s32 %s13, 2
        // Predicated region
        $region45: #{tpu_custom_call.1} parent=43 // pred_check
          %p922 = pneg %p158
        $region46: #{tpu_custom_call.1} parent=43 // pred_check_branch
          %924 = sbr.rel (%p922) target = $region48
        $region47: #{tpu_custom_call.1} parent=43 // pred_region
          %s925 = sand.u32 %s143, 1
          %s926 = scalar_lea.sflag [#allocation4], %s925
          %s927 = sand.u32 %s143, 1
          %s928 = smul.addr %s927, 8
          %s929 = scalar_lea.vmem [#allocation3], %s928
          %930 = dma.done %s926, 128
        $region48: #{tpu_custom_call.1} parent=43 // pred_fallthru
          _
      $region44: #{tpu_custom_call.1} parent=5 // pred_fallthru
        _
    $region6: #{tpu_custom_call.1} parent=1 // loop_footer
      %s17 = sadd.s32 1, %s13
    $region7: #{tpu_custom_call.1} parent=1 // loop_footer_branch
      %12 = sbr.rel target = $region3
    $region8: #{tpu_custom_call.1} parent=1 // loop_exit
      _
    %931 = vsyncpa [#allocation4], 1
    %s932 = scalar_lea.sflag [#allocation4], 1
    %933 = vsyncpa %s932, 1

</llo_original>
